<compile_context>
chip_gen: v5e
topology: v5e:2x2
jax: 0.10.0
libtpu: 0.0.40
codegen_flags: <defaults>
</compile_context>

<pallas_src>
import jax
import jax.numpy as jnp
from jax.experimental import pallas as pl
from jax.experimental.pallas import tpu as pltpu


def _round_up(a, b):
    return (a + b - 1) // b * b


def _cdiv(a, b):
    return (a + b - 1) // b


def _vmem_capacity_bytes():
    """Physical VMEM per TensorCore; conservative (v7x-sized) fallback."""
    try:
        return int(pltpu.get_tpu_info().vmem_capacity_bytes)
    except Exception:
        return 64 * 1024 * 1024


def _make_ffn_kernel(resident):
    """resident=True : W1/W2/b1 blocks hold ALL F chunks (resident in VMEM),
                       the kernel indexes chunk `f` dynamically.
       resident=False: one F chunk is streamed per grid step (leading dim 1)."""

    def kernel(x_ref, w1_ref, b1_ref, w2_ref, b2_ref, o_ref, acc_ref):
        # x_ref: [tm, Ep]; w1_ref: [nf|1, Ep, tf]; b1_ref: [nf|1, 1, tf] (f32);
        # w2_ref: [nf|1, tf, Ep]; b2_ref: [1, Ep] (f32); acc_ref: [tm, Ep] f32.
        f = pl.program_id(1)
        idx = f if resident else 0

        @pl.when(f == 0)
        def _():
            acc_ref[...] = jnp.zeros_like(acc_ref)

        # linear1 on the MXU (f32 accumulation); bias + ReLU on the VPU in f32.
        h = jnp.dot(x_ref[...], w1_ref[idx],
                    preferred_element_type=jnp.float32)
        h = jnp.maximum(h + b1_ref[idx], 0.0)
        # dropout (eval/inference mode) == identity.

        # linear2: partial contribution of this F chunk, accumulated in f32.
        acc_ref[...] += jnp.dot(h.astype(w2_ref.dtype), w2_ref[idx],
                                preferred_element_type=jnp.float32)

        @pl.when(f == pl.num_programs(1) - 1)
        def _():
            o_ref[...] = (acc_ref[...] + b2_ref[...]).astype(o_ref.dtype)

    return kernel


def feed_forward(x, w1, b1, w2, b2, *, tm=None, tf=None,
                 compute_dtype=jnp.bfloat16, _force_streamed=False):
    """x: [..., E].  w1: [E, F], b1: [F], w2: [F, E], b2: [E].

    compute_dtype: dtype of the MXU operands (x, W1, W2); default bf16.
    Accumulation, bias and ReLU are always f32; output keeps x.dtype.
    """
    orig_shape = x.shape
    out_dtype = x.dtype
    E = orig_shape[-1]
    F = w1.shape[1]

    x2d = x.reshape(-1, E)
    M = x2d.shape[0]

    it = jnp.dtype(compute_dtype).itemsize
    out_it = jnp.dtype(out_dtype).itemsize

    E_pad = _round_up(E, 128)                    # lane-dense output slab

    # --- generation-aware VMEM budget ---------------------------------------
    vmem_cap = _vmem_capacity_bytes()
    vmem_limit = vmem_cap * 3 // 4               # 96 MiB v5e/v6e, 48 MiB v7x
    headroom = 2 * 1024 * 1024                   # compiler-internal scratch

    # --- M tiling: balanced tiles, >=2 tiles when possible (v7x megacore) ---
    per_row = E_pad * (4 + 2 * it + 2 * out_it)  # f32 acc + 2x x + 2x out
    tm_cap = max(16, (vmem_limit // 2) // per_row // 16 * 16)
    tm_target = tm if tm is not None else 512
    tm_target = min(max(16, _round_up(tm_target, 16)), tm_cap)
    n_m = _cdiv(M, tm_target)
    if n_m == 1 and _round_up(M, 16) >= 32:
        n_m = 2                                  # keep both v7x TCs busy
    tm_eff = _round_up(_cdiv(M, n_m), 16)
    M_pad = tm_eff * n_m

    fixed = tm_eff * per_row + 2 * E_pad * 4     # + b2 buffers
    budget = max(0, vmem_limit - fixed - headroom)

    # --- F tiling / weight residency decision -------------------------------
    tf_target = max(128, _round_up(tf if tf is not None else 1024, 128))
    F_pad_min = _round_up(F, 128)
    tf_res = min(tf_target, F_pad_min)
    # Full weights, double-buffered (default pipeline depth), + b1 + h temp.
    w_full_alloc = (4 * E_pad * F_pad_min * it + 2 * F_pad_min * 4
                    + tm_eff * tf_res * 4)
    resident = (not _force_streamed) and (w_full_alloc <= budget)

    if resident:
        n_f = _cdiv(F, tf_res)
    else:
        # Per unit of tf: 2x(W1 col + W2 row) double-buffered + b1 + h temp.
        per_tf = 4 * E_pad * it + 8 + 4 * tm_eff
        tf_cap = max(128, budget // max(per_tf, 1) // 128 * 128)
        n_f = _cdiv(F, min(tf_target, tf_cap, F_pad_min))
    tf_eff = _round_up(_cdiv(F, n_f), 128)
    F_pad = tf_eff * n_f

    # --- pad + F-chunk the operands (zeros are mathematically inert) --------
    xp = jnp.pad(x2d, ((0, M_pad - M), (0, E_pad - E))).astype(compute_dtype)
    w1p = jnp.pad(w1, ((0, E_pad - E), (0, F_pad - F))).astype(compute_dtype)
    w1p = w1p.reshape(E_pad, n_f, tf_eff).transpose(1, 0, 2)   # [n_f, Ep, tf]
    w2p = jnp.pad(w2, ((0, F_pad - F), (0, E_pad - E))).astype(compute_dtype)
    w2p = w2p.reshape(n_f, tf_eff, E_pad)                      # [n_f, tf, Ep]
    b1p = jnp.pad(b1, (0, F_pad - F)).astype(jnp.float32)
    b1p = b1p.reshape(n_f, 1, tf_eff)
    b2p = jnp.pad(b2, (0, E_pad - E)).astype(jnp.float32).reshape(1, E_pad)

    # --- BlockSpecs ----------------------------------------------------------
    if resident:
        w1_spec = pl.BlockSpec((n_f, E_pad, tf_eff), lambda i, f: (0, 0, 0))
        b1_spec = pl.BlockSpec((n_f, 1, tf_eff),     lambda i, f: (0, 0, 0))
        w2_spec = pl.BlockSpec((n_f, tf_eff, E_pad), lambda i, f: (0, 0, 0))
    else:
        w1_spec = pl.BlockSpec((1, E_pad, tf_eff), lambda i, f: (f, 0, 0))
        b1_spec = pl.BlockSpec((1, 1, tf_eff),     lambda i, f: (f, 0, 0))
        w2_spec = pl.BlockSpec((1, tf_eff, E_pad), lambda i, f: (f, 0, 0))

    grid = (n_m, n_f)

    # --- advisory cost estimate (weights re-streamed n_m times if not resident)
    w_bytes = (w1p.size + w2p.size) * it
    w_passes = 1 if resident else n_m
    cost = pl.CostEstimate(
        flops=4 * M_pad * E_pad * F_pad,           # two matmuls
        transcendentals=0,
        bytes_accessed=int(xp.size * it + w_passes * w_bytes
                           + b1p.size * 4 + b2p.size * 4
                           + M_pad * E_pad * out_it),
    )

    out = pl.pallas_call(
        _make_ffn_kernel(resident),
        out_shape=jax.ShapeDtypeStruct((M_pad, E_pad), out_dtype),
        grid_spec=pltpu.PrefetchScalarGridSpec(
            num_scalar_prefetch=0,
            grid=grid,
            in_specs=[
                pl.BlockSpec((tm_eff, E_pad), lambda i, f: (i, 0)),   # x tile
                w1_spec, b1_spec, w2_spec,
                pl.BlockSpec((1, E_pad), lambda i, f: (0, 0)),        # b2
            ],
            out_specs=pl.BlockSpec((tm_eff, E_pad), lambda i, f: (i, 0)),
            scratch_shapes=[pltpu.VMEM((tm_eff, E_pad), jnp.float32)],
        ),
        compiler_params=pltpu.CompilerParams(
            dimension_semantics=("parallel", "arbitrary"),
            vmem_limit_bytes=int(vmem_limit),
        ),
        cost_estimate=cost,
    )(xp, w1p, b1p, w2p, b2p)

    return out[:M, :E].reshape(orig_shape)


def init_params(key, embed_dim, ff_dim):
    """Deterministic init mirroring nn.Linear's uniform(-1/sqrt(fan_in), ...)."""
    k1, k2, k3, k4 = jax.random.split(key, 4)
    lim1 = 1.0 / (embed_dim ** 0.5)
    lim2 = 1.0 / (ff_dim ** 0.5)
    # Stored already transposed relative to PyTorch's (out, in) convention.
    w1 = jax.random.uniform(k1, (embed_dim, ff_dim), jnp.float32, -lim1, lim1)
    b1 = jax.random.uniform(k2, (ff_dim,), jnp.float32, -lim1, lim1)
    w2 = jax.random.uniform(k3, (ff_dim, embed_dim), jnp.float32, -lim2, lim2)
    b2 = jax.random.uniform(k4, (embed_dim,), jnp.float32, -lim2, lim2)
    return w1, b1, w2, b2


def _ref(x, w1, b1, w2, b2):
    return jnp.maximum(x @ w1 + b1, 0.0) @ w2 + b2


if __name__ == "__main__":
    key = jax.random.PRNGKey(0)

    # --- Case 1: lane-aligned shapes, f32 operands (tight numeric check) -----
    batch, seq, embed_dim, ff_dim = 2, 8, 128, 256
    kx, kp, key = jax.random.split(key, 3)
    x = jax.random.normal(kx, (batch, seq, embed_dim), dtype=jnp.float32)
    w1, b1, w2, b2 = init_params(kp, embed_dim, ff_dim)
    ref = _ref(x, w1, b1, w2, b2)

    out = jax.block_until_ready(
        feed_forward(x, w1, b1, w2, b2, compute_dtype=jnp.float32))
    assert out.shape == x.shape
    assert jnp.allclose(out, ref, atol=1e-4, rtol=1e-4)

    # --- Case 2: odd (non-multiple) shapes, exercises M/E/F padding ----------
    kx2, kp2, key = jax.random.split(key, 3)
    x2 = jax.random.normal(kx2, (3, 5, 96), dtype=jnp.float32)
    p2 = init_params(kp2, 96, 200)
    out2 = jax.block_until_ready(
        feed_forward(x2, *p2, compute_dtype=jnp.float32))
    assert out2.shape == x2.shape
    assert jnp.allclose(out2, _ref(x2, *p2), atol=1e-4, rtol=1e-4)

    # --- Case 3: default bf16 MXU operands, f32 accumulation -----------------
    out3 = jax.block_until_ready(feed_forward(x, w1, b1, w2, b2))
    assert out3.shape == x.shape
    assert jnp.allclose(out3, ref, atol=5e-2, rtol=5e-2)

    # --- Case 4: streamed (non-resident) weight path, multi-tile M/F grid ----
    kx4, kp4, key = jax.random.split(key, 3)
    x4 = jax.random.normal(kx4, (4, 24, 128), dtype=jnp.float32)
    p4 = init_params(kp4, 128, 256)
    ref4 = _ref(x4, *p4)
    out4 = jax.block_until_ready(
        feed_forward(x4, *p4, compute_dtype=jnp.float32,
                     tm=32, tf=128, _force_streamed=True))
    assert out4.shape == x4.shape
    assert jnp.allclose(out4, ref4, atol=1e-4, rtol=1e-4)

    # --- Case 5: resident weights with multiple M tiles and multiple F chunks
    out5 = jax.block_until_ready(
        feed_forward(x4, *p4, compute_dtype=jnp.float32, tf=128))
    assert out5.shape == x4.shape
    assert jnp.allclose(out5, ref4, atol=1e-4, rtol=1e-4)

    print("KERNEL_OK")
</pallas_src>

<mosaic_0001>
module attributes {stable_mosaic.version = 11 : i64} {
  func.func @kernel(%arg0: i32, %arg1: i32, %arg2: memref<16x128xf32, #tpu.memory_space<vmem>>, %arg3: memref<1x128x256xf32, #tpu.memory_space<vmem>>, %arg4: memref<1x1x256xf32, #tpu.memory_space<vmem>>, %arg5: memref<1x256x128xf32, #tpu.memory_space<vmem>>, %arg6: memref<1x128xf32, #tpu.memory_space<vmem>>, %arg7: memref<16x128xf32, #tpu.memory_space<vmem>>, %arg8: memref<16x128xf32, #tpu.memory_space<vmem>>) attributes {dimension_semantics = [#tpu.dimension_semantics<parallel>, #tpu.dimension_semantics<arbitrary>], iteration_bounds = array<i64: 1, 1>, scalar_prefetch = 0 : i64, scratch_operands = 1 : i64, tpu.core_type = #tpu.core_type<tc>, window_params = [{transform_indices = @transform_0, window_bounds = array<i64: 16, 128>}, {pipeline_mode = #tpu.pipeline_mode<synchronous>, transform_indices = @transform_1, window_bounds = array<i64: 1, 128, 256>}, {pipeline_mode = #tpu.pipeline_mode<synchronous>, transform_indices = @transform_2, window_bounds = array<i64: 1, 1, 256>}, {pipeline_mode = #tpu.pipeline_mode<synchronous>, transform_indices = @transform_3, window_bounds = array<i64: 1, 256, 128>}, {pipeline_mode = #tpu.pipeline_mode<synchronous>, transform_indices = @transform_4, window_bounds = array<i64: 1, 128>}, {transform_indices = @transform_5, window_bounds = array<i64: 16, 128>}]} {
    %c0_i32 = arith.constant 0 : i32
    %0 = arith.cmpi eq, %arg1, %c0_i32 : i32
    %1 = arith.extui %0 : i1 to i32
    %c0_i32_0 = arith.constant 0 : i32
    %2 = arith.cmpi ne, %1, %c0_i32_0 : i32
    scf.if %2 {
      %cst_16 = arith.constant 0.000000e+00 : f32
      %25 = vector.broadcast %cst_16 : f32 to vector<16x128xf32>
      %c0_17 = arith.constant 0 : index
      %c0_18 = arith.constant 0 : index
      %26 = vector.load %arg8[%c0_17, %c0_18] : memref<16x128xf32, #tpu.memory_space<vmem>>, vector<16x128xf32>
      tpu.vector_store %arg8[%c0_17, %c0_18], %25 {strides = array<i32>} : memref<16x128xf32, #tpu.memory_space<vmem>>, vector<16x128xf32>,
    } else {
    }
    %c0 = arith.constant 0 : index
    %c0_1 = arith.constant 0 : index
    %3 = vector.load %arg2[%c0, %c0_1] : memref<16x128xf32, #tpu.memory_space<vmem>>, vector<16x128xf32>
    %4 = arith.index_cast %arg1 : i32 to index
    %c0_2 = arith.constant 0 : index
    %c0_3 = arith.constant 0 : index
    %5 = vector.load %arg3[%4, %c0_2, %c0_3] : memref<1x128x256xf32, #tpu.memory_space<vmem>>, vector<1x128x256xf32>
    %6 = vector.shape_cast %5 : vector<1x128x256xf32> to vector<128x256xf32>
    %cst = arith.constant dense<0.000000e+00> : vector<16x256xf32>
    %7 = tpu.matmul %3, %6, %cst {dimension_numbers = #tpu.dot_dimension_numbers<[1], [0], [0], [1], [0, 0, 1, 1], [], []>} : vector<16x128xf32>, vector<128x256xf32>, vector<16x256xf32> -> vector<16x256xf32>
    %8 = arith.index_cast %arg1 : i32 to index
    %c0_4 = arith.constant 0 : index
    %c0_5 = arith.constant 0 : index
    %9 = vector.load %arg4[%8, %c0_4, %c0_5] : memref<1x1x256xf32, #tpu.memory_space<vmem>>, vector<1x1x256xf32>
    %10 = vector.shape_cast %9 : vector<1x1x256xf32> to vector<1x256xf32>
    %11 = vector.broadcast %10 : vector<1x256xf32> to vector<16x256xf32>
    %12 = arith.addf %7, %11 : vector<16x256xf32>
    %cst_6 = arith.constant 0.000000e+00 : f32
    %13 = vector.broadcast %cst_6 : f32 to vector<16x256xf32>
    %14 = arith.maximumf %12, %13 : vector<16x256xf32>
    %c0_7 = arith.constant 0 : index
    %c0_8 = arith.constant 0 : index
    %15 = vector.load %arg8[%c0_7, %c0_8] : memref<16x128xf32, #tpu.memory_space<vmem>>, vector<16x128xf32>
    %16 = arith.index_cast %arg1 : i32 to index
    %c0_9 = arith.constant 0 : index
    %c0_10 = arith.constant 0 : index
    %17 = vector.load %arg5[%16, %c0_9, %c0_10] : memref<1x256x128xf32, #tpu.memory_space<vmem>>, vector<1x256x128xf32>
    %18 = vector.shape_cast %17 : vector<1x256x128xf32> to vector<256x128xf32>
    %cst_11 = arith.constant dense<0.000000e+00> : vector<16x128xf32>
    %19 = tpu.matmul %14, %18, %cst_11 {dimension_numbers = #tpu.dot_dimension_numbers<[1], [0], [0], [1], [0, 0, 1, 1], [], []>} : vector<16x256xf32>, vector<256x128xf32>, vector<16x128xf32> -> vector<16x128xf32>
    %20 = arith.addf %15, %19 : vector<16x128xf32>
    %c0_12 = arith.constant 0 : index
    %c0_13 = arith.constant 0 : index
    %21 = vector.load %arg8[%c0_12, %c0_13] : memref<16x128xf32, #tpu.memory_space<vmem>>, vector<16x128xf32>
    tpu.vector_store %arg8[%c0_12, %c0_13], %20 {strides = array<i32>} : memref<16x128xf32, #tpu.memory_space<vmem>>, vector<16x128xf32>,
    %c0_i32_14 = arith.constant 0 : i32
    %22 = arith.cmpi eq, %arg1, %c0_i32_14 : i32
    %23 = arith.extui %22 : i1 to i32
    %c0_i32_15 = arith.constant 0 : i32
    %24 = arith.cmpi ne, %23, %c0_i32_15 : i32
    scf.if %24 {
      %c0_16 = arith.constant 0 : index
      %c0_17 = arith.constant 0 : index
      %25 = vector.load %arg8[%c0_16, %c0_17] : memref<16x128xf32, #tpu.memory_space<vmem>>, vector<16x128xf32>
      %c0_18 = arith.constant 0 : index
      %c0_19 = arith.constant 0 : index
      %26 = vector.load %arg6[%c0_18, %c0_19] : memref<1x128xf32, #tpu.memory_space<vmem>>, vector<1x128xf32>
      %27 = vector.broadcast %26 : vector<1x128xf32> to vector<16x128xf32>
      %28 = arith.addf %25, %27 : vector<16x128xf32>
      %c0_20 = arith.constant 0 : index
      %c0_21 = arith.constant 0 : index
      %29 = vector.load %arg7[%c0_20, %c0_21] : memref<16x128xf32, #tpu.memory_space<vmem>>, vector<16x128xf32>
      tpu.vector_store %arg7[%c0_20, %c0_21], %28 {strides = array<i32>} : memref<16x128xf32, #tpu.memory_space<vmem>>, vector<16x128xf32>,
    } else {
    }
    return
  }
  func.func @transform_0(%arg0: i32, %arg1: i32) -> (i32, i32) {
    %c0_i32 = arith.constant 0 : i32
    %c0_i32_0 = arith.constant 0 : i32
    return %arg0, %c0_i32 : i32, i32
  }
  func.func @transform_1(%arg0: i32, %arg1: i32) -> (i32, i32, i32) {
    %c0_i32 = arith.constant 0 : i32
    %c0_i32_0 = arith.constant 0 : i32
    %c0_i32_1 = arith.constant 0 : i32
    %c0_i32_2 = arith.constant 0 : i32
    return %c0_i32, %c0_i32_0, %c0_i32_1 : i32, i32, i32
  }
  func.func @transform_2(%arg0: i32, %arg1: i32) -> (i32, i32, i32) {
    %c0_i32 = arith.constant 0 : i32
    %c0_i32_0 = arith.constant 0 : i32
    %c0_i32_1 = arith.constant 0 : i32
    %c0_i32_2 = arith.constant 0 : i32
    return %c0_i32, %c0_i32_0, %c0_i32_1 : i32, i32, i32
  }
  func.func @transform_3(%arg0: i32, %arg1: i32) -> (i32, i32, i32) {
    %c0_i32 = arith.constant 0 : i32
    %c0_i32_0 = arith.constant 0 : i32
    %c0_i32_1 = arith.constant 0 : i32
    %c0_i32_2 = arith.constant 0 : i32
    return %c0_i32, %c0_i32_0, %c0_i32_1 : i32, i32, i32
  }
  func.func @transform_4(%arg0: i32, %arg1: i32) -> (i32, i32) {
    %c0_i32 = arith.constant 0 : i32
    %c0_i32_0 = arith.constant 0 : i32
    %c0_i32_1 = arith.constant 0 : i32
    return %c0_i32, %c0_i32_0 : i32, i32
  }
  func.func @transform_5(%arg0: i32, %arg1: i32) -> (i32, i32) {
    %c0_i32 = arith.constant 0 : i32
    %c0_i32_0 = arith.constant 0 : i32
    return %arg0, %c0_i32 : i32, i32
  }
}

</mosaic_0001>

<llo_original>
// kernel: tpu_custom_call.1
$region0: #{tpu_custom_call.1}
  #allocation0 [shape = 'u32[]', space=smem, size = 0x4, offset = 0x4, fixed_abs, tag = 'smem constant byte address 0x4 - core index']
  #allocation1 [shape = 'u32[72,128]{1,0:T(1,128)}', space=vmem, size = 0x9000, scoped, tag = 'internal scratch']
  #allocation2 [shape = 'f32[16,128]{1,0:T(8,128)}', space=vmem, size = 0x2000, scoped, tag = 'scratch operand']
  %s0 = inlined_call_operand.hbm [shape: f32[16,128], index: 0, kind: input, shape index: {}]
  %s1 = inlined_call_operand.hbm [shape: f32[1,128,256], index: 1, kind: input, shape index: {}]
  %s2 = inlined_call_operand.hbm [shape: f32[1,1,256], index: 2, kind: input, shape index: {}]
  %s3 = inlined_call_operand.hbm [shape: f32[1,256,128], index: 3, kind: input, shape index: {}]
  %s4 = inlined_call_operand.vmem [shape: f32[1,128], index: 4, kind: input, shape index: {}]
  %s5 = inlined_call_operand.hbm [shape: f32[16,128], index: 5, kind: output, shape index: {}]
  %s6 = sld [smem:[#allocation0]]
  $region54: #{tpu_custom_call.1} parent=0
    _
  %s8 = ssub.s32 1, %s6
  %s9 = scalar_select 0, %s8, %s6
  $region1: #{tpu_custom_call.1} parent=0
    #allocation3 [shape = 'u8[8192]{0}', space=vmem, size = 0x2000, scoped, tag = 'input window, operand 0, single buffered']
    #allocation4 [shape = 's32[1]{0}', space=sflag, size = 0x4, scoped, tag = 'scoped memory for tpu_custom_call.1']
    #allocation5 [shape = 's32[1]{0}', space=sflag, size = 0x4, scoped, tag = 'scoped memory for tpu_custom_call.1']
    #allocation6 [shape = 'u8[131072]{0}', space=vmem, size = 0x20000, scoped, tag = 'input window, operand 1, single buffered']
    #allocation7 [shape = 's32[1]{0}', space=sflag, size = 0x4, scoped, tag = 'scoped memory for tpu_custom_call.1']
    #allocation8 [shape = 'u8[1024]{0}', space=vmem, size = 0x400, scoped, tag = 'input window, operand 2, single buffered']
    #allocation9 [shape = 'u8[131072]{0}', space=vmem, size = 0x20000, scoped, tag = 'input window, operand 3, single buffered']
    #allocation10 [shape = 's32[1]{0}', space=sflag, size = 0x4, scoped, tag = 'scoped memory for tpu_custom_call.1']
    #allocation11 [shape = 'u8[8192]{0}', space=vmem, size = 0x2000, scoped, tag = 'output window, operand 0, single buffered']
    %10 = vsyncpa [#allocation4], 0
    %11 = vsyncpa [#allocation7], 0
    %12 = vsyncpa [#allocation10], 0
    %13 = vsyncpa [#allocation5], 0
    // Predicated region
    $region2: #{tpu_custom_call.1} parent=1 // pred_check
      _
    $region3: #{tpu_custom_call.1} parent=1 // pred_check_branch
      %15 = sbr.rel (0) target = $region5
    $region4: #{tpu_custom_call.1} parent=1 // pred_region
      %17 = vsyncadd [#allocation4], 0
      %s18 = sshll.u32 %s0, 4
      %s19 = int_to_ptr.hbm [resolvable:$true] %s18
      %s20 = sshll.u32 [#allocation3], 4
      %s21 = int_to_ptr.vmem [resolvable:$true] %s20
      %26 = dma.hbm_to_vmem [thread:$0]  %s19, 256, %s21, [#allocation4], 128, 128, 8
    $region5: #{tpu_custom_call.1} parent=1 // pred_fallthru
      _
    // Predicated region
    $region6: #{tpu_custom_call.1} parent=1 // pred_check
      _
    $region7: #{tpu_custom_call.1} parent=1 // pred_check_branch
      %28 = sbr.rel (0) target = $region9
    $region8: #{tpu_custom_call.1} parent=1 // pred_region
      %30 = vsyncadd [#allocation7], 0
      %s31 = sshll.u32 %s1, 4
      %s32 = int_to_ptr.hbm [resolvable:$true] %s31
      %s33 = sshll.u32 [#allocation6], 4
      %s34 = int_to_ptr.vmem [resolvable:$true] %s33
      %39 = dma.hbm_to_vmem [thread:$0]  %s32, 4096, %s34, [#allocation7], 256, 256, 16
    $region9: #{tpu_custom_call.1} parent=1 // pred_fallthru
      _
    // Predicated region
    $region10: #{tpu_custom_call.1} parent=1 // pred_check
      _
    $region11: #{tpu_custom_call.1} parent=1 // pred_check_branch
      %41 = sbr.rel (0) target = $region13
    $region12: #{tpu_custom_call.1} parent=1 // pred_region
      %43 = vsyncadd [#allocation7], 0
      %s45 = sshll.u32 %s2, 4
      %s46 = int_to_ptr.hbm [resolvable:$true] %s45
      %s47 = sshll.u32 [#allocation8], 4
      %s48 = int_to_ptr.vmem [resolvable:$true] %s47
      %50 = dma.hbm_to_vmem [thread:$0]  %s46, 32, %s48, [#allocation7]
    $region13: #{tpu_custom_call.1} parent=1 // pred_fallthru
      _
    // Predicated region
    $region14: #{tpu_custom_call.1} parent=1 // pred_check
      _
    $region15: #{tpu_custom_call.1} parent=1 // pred_check_branch
      %52 = sbr.rel (0) target = $region17
    $region16: #{tpu_custom_call.1} parent=1 // pred_region
      %54 = vsyncadd [#allocation10], 0
      %s55 = sshll.u32 %s3, 4
      %s56 = int_to_ptr.hbm [resolvable:$true] %s55
      %s57 = sshll.u32 [#allocation9], 4
      %s58 = int_to_ptr.vmem [resolvable:$true] %s57
      %63 = dma.hbm_to_vmem [thread:$0]  %s56, 4096, %s58, [#allocation10], 128, 128, 8
    $region17: #{tpu_custom_call.1} parent=1 // pred_fallthru
      _
    // Predicated region
    $region18: #{tpu_custom_call.1} parent=1 // pred_check
      _
    $region19: #{tpu_custom_call.1} parent=1 // pred_check_branch
      %65 = sbr.rel (0) target = $region21
    $region20: #{tpu_custom_call.1} parent=1 // pred_region
      _
    $region21: #{tpu_custom_call.1} parent=1 // pred_fallthru
      _
    // Predicated region
    $region22: #{tpu_custom_call.1} parent=1 // pred_check
      _
    $region23: #{tpu_custom_call.1} parent=1 // pred_check_branch
      %67 = sbr.rel (0) target = $region25
    $region24: #{tpu_custom_call.1} parent=1 // pred_region
      %69 = dma.done [#allocation4], 256
    $region25: #{tpu_custom_call.1} parent=1 // pred_fallthru
      _
    // Predicated region
    $region26: #{tpu_custom_call.1} parent=1 // pred_check
      _
    $region27: #{tpu_custom_call.1} parent=1 // pred_check_branch
      %71 = sbr.rel (0) target = $region29
    $region28: #{tpu_custom_call.1} parent=1 // pred_region
      %73 = dma.done [#allocation7], 4096
    $region29: #{tpu_custom_call.1} parent=1 // pred_fallthru
      _
    // Predicated region
    $region30: #{tpu_custom_call.1} parent=1 // pred_check
      _
    $region31: #{tpu_custom_call.1} parent=1 // pred_check_branch
      %75 = sbr.rel (0) target = $region33
    $region32: #{tpu_custom_call.1} parent=1 // pred_region
      %77 = dma.done [#allocation7], 32
    $region33: #{tpu_custom_call.1} parent=1 // pred_fallthru
      _
    // Predicated region
    $region34: #{tpu_custom_call.1} parent=1 // pred_check
      _
    $region35: #{tpu_custom_call.1} parent=1 // pred_check_branch
      %79 = sbr.rel (0) target = $region37
    $region36: #{tpu_custom_call.1} parent=1 // pred_region
      %81 = dma.done [#allocation10], 4096
    $region37: #{tpu_custom_call.1} parent=1 // pred_fallthru
      _
    %p82 = scmp.eq.s32.totalorder 0, 0
    // Predicated region
    $region38: #{tpu_custom_call.1} parent=1 // pred_check
      %p83 = pneg %p82
    $region39: #{tpu_custom_call.1} parent=1 // pred_check_branch
      %85 = sbr.rel (%p83) target = $region41
    $region40: #{tpu_custom_call.1} parent=1 // pred_region
      %86 = vst [vmem:[#allocation2] sm:$0xff] 0.0
      %87 = vst [vmem:[#allocation2 + $0x8] sm:$0xff] 0.0
    $region41: #{tpu_custom_call.1} parent=1 // pred_fallthru
      _
    %v88 = vld [vmem:[#allocation3] sm:$0xff]
    %v89 = vld [vmem:[#allocation3 + $0x8] sm:$0xff]
    %s90 = smul.u32 0, 32
    %s91 = smul.addr %s90, 8
    %s92 = scalar_lea.vmem [#allocation6], %s91
    %v93 = vld [vmem:[%s92] sm:$0xff]
    %v94 = vld [vmem:[%s92 + $0x8] sm:$0xff]
    %v95 = vld [vmem:[%s92 + $0x10] sm:$0xff]
    %v96 = vld [vmem:[%s92 + $0x18] sm:$0xff]
    %v97 = vld [vmem:[%s92 + $0x20] sm:$0xff]
    %v98 = vld [vmem:[%s92 + $0x28] sm:$0xff]
    %v99 = vld [vmem:[%s92 + $0x30] sm:$0xff]
    %v100 = vld [vmem:[%s92 + $0x38] sm:$0xff]
    %v101 = vld [vmem:[%s92 + $0x40] sm:$0xff]
    %v102 = vld [vmem:[%s92 + $0x48] sm:$0xff]
    %v103 = vld [vmem:[%s92 + $0x50] sm:$0xff]
    %v104 = vld [vmem:[%s92 + $0x58] sm:$0xff]
    %v105 = vld [vmem:[%s92 + $0x60] sm:$0xff]
    %v106 = vld [vmem:[%s92 + $0x68] sm:$0xff]
    %v107 = vld [vmem:[%s92 + $0x70] sm:$0xff]
    %v108 = vld [vmem:[%s92 + $0x78] sm:$0xff]
    %v109 = vld [vmem:[%s92 + $0x80] sm:$0xff]
    %v110 = vld [vmem:[%s92 + $0x88] sm:$0xff]
    %v111 = vld [vmem:[%s92 + $0x90] sm:$0xff]
    %v112 = vld [vmem:[%s92 + $0x98] sm:$0xff]
    %v113 = vld [vmem:[%s92 + $0xa0] sm:$0xff]
    %v114 = vld [vmem:[%s92 + $0xa8] sm:$0xff]
    %v115 = vld [vmem:[%s92 + $0xb0] sm:$0xff]
    %v116 = vld [vmem:[%s92 + $0xb8] sm:$0xff]
    %v117 = vld [vmem:[%s92 + $0xc0] sm:$0xff]
    %v118 = vld [vmem:[%s92 + $0xc8] sm:$0xff]
    %v119 = vld [vmem:[%s92 + $0xd0] sm:$0xff]
    %v120 = vld [vmem:[%s92 + $0xd8] sm:$0xff]
    %v121 = vld [vmem:[%s92 + $0xe0] sm:$0xff]
    %v122 = vld [vmem:[%s92 + $0xe8] sm:$0xff]
    %v123 = vld [vmem:[%s92 + $0xf0] sm:$0xff]
    %v124 = vld [vmem:[%s92 + $0xf8] sm:$0xff]
    %s125 = smul.u32 0, 2
    %s126 = scalar_lea.vmem [#allocation8], %s125
    %v127 = vld [vmem:[%s126] sm:$0x3]
    %v129 = vperm.slane %v127, 0
    %v130 = vperm.slane %v127, 1
    %133 = vmatpush.msra.mxu0 %v123
    %134 = vmatpush.msra.mxu0 %v121
    %135 = vmatpush.msra.mxu0 %v119
    %136 = vmatpush.msra.mxu0 %v117
    %137 = vmatpush.msra.mxu0 %v115
    %138 = vmatpush.msra.mxu0 %v113
    %139 = vmatpush.msra.mxu0 %v111
    %140 = vmatpush.msra.mxu0 %v109
    %141 = vmatpush.msra.mxu0 %v107
    %142 = vmatpush.msra.mxu0 %v105
    %143 = vmatpush.msra.mxu0 %v103
    %144 = vmatpush.msra.mxu0 %v101
    %145 = vmatpush.msra.mxu0 %v99
    %146 = vmatpush.msra.mxu0 %v97
    %147 = vmatpush.msra.mxu0 %v95
    %148 = vmatpush.msra.mxu0 %v93
    %149 = vmatmul.f32.gmra.mxu0 %v88
    %v150 = vpop.f32.mrf.mxu0
    %v151 = vadd.f32 %v129, %v150
    %152 = vmatmul.f32.gmra.mxu0 %v89
    %v153 = vpop.f32.mrf.mxu0
    %v154 = vadd.f32 %v129, %v153
    %155 = vdwg.mxu0
    %156 = vmatpush.msra.mxu0 %v124
    %157 = vmatpush.msra.mxu0 %v122
    %158 = vmatpush.msra.mxu0 %v120
    %159 = vmatpush.msra.mxu0 %v118
    %160 = vmatpush.msra.mxu0 %v116
    %161 = vmatpush.msra.mxu0 %v114
    %162 = vmatpush.msra.mxu0 %v112
    %163 = vmatpush.msra.mxu0 %v110
    %164 = vmatpush.msra.mxu0 %v108
    %165 = vmatpush.msra.mxu0 %v106
    %166 = vmatpush.msra.mxu0 %v104
    %167 = vmatpush.msra.mxu0 %v102
    %168 = vmatpush.msra.mxu0 %v100
    %169 = vmatpush.msra.mxu0 %v98
    %170 = vmatpush.msra.mxu0 %v96
    %171 = vmatpush.msra.mxu0 %v94
    %172 = vmatmul.f32.gmra.mxu0 %v88
    %v173 = vpop.f32.mrf.mxu0
    %v174 = vadd.f32 %v130, %v173
    %175 = vmatmul.f32.gmra.mxu0 %v89
    %v176 = vpop.f32.mrf.mxu0
    %v177 = vadd.f32 %v130, %v176
    %178 = vdwg.mxu0
    %v179 = vmax.f32 %v151, 0.0
    %v180 = vmax.f32 %v174, 0.0
    %v181 = vmax.f32 %v154, 0.0
    %v182 = vmax.f32 %v177, 0.0
    %v183 = vld [vmem:[#allocation2] sm:$0xff]
    %v184 = vld [vmem:[#allocation2 + $0x8] sm:$0xff]
    %s185 = smul.u32 0, 256
    %s186 = scalar_lea.vmem [#allocation9], %s185
    %v187 = vld [vmem:[%s186] sm:$0xff]
    %v188 = vld [vmem:[%s186 + $0x8] sm:$0xff]
    %v189 = vld [vmem:[%s186 + $0x10] sm:$0xff]
    %v190 = vld [vmem:[%s186 + $0x18] sm:$0xff]
    %v191 = vld [vmem:[%s186 + $0x20] sm:$0xff]
    %v192 = vld [vmem:[%s186 + $0x28] sm:$0xff]
    %v193 = vld [vmem:[%s186 + $0x30] sm:$0xff]
    %v194 = vld [vmem:[%s186 + $0x38] sm:$0xff]
    %v195 = vld [vmem:[%s186 + $0x40] sm:$0xff]
    %v196 = vld [vmem:[%s186 + $0x48] sm:$0xff]
    %v197 = vld [vmem:[%s186 + $0x50] sm:$0xff]
    %v198 = vld [vmem:[%s186 + $0x58] sm:$0xff]
    %v199 = vld [vmem:[%s186 + $0x60] sm:$0xff]
    %v200 = vld [vmem:[%s186 + $0x68] sm:$0xff]
    %v201 = vld [vmem:[%s186 + $0x70] sm:$0xff]
    %v202 = vld [vmem:[%s186 + $0x78] sm:$0xff]
    %v203 = vld [vmem:[%s186 + $0x80] sm:$0xff]
    %v204 = vld [vmem:[%s186 + $0x88] sm:$0xff]
    %v205 = vld [vmem:[%s186 + $0x90] sm:$0xff]
    %v206 = vld [vmem:[%s186 + $0x98] sm:$0xff]
    %v207 = vld [vmem:[%s186 + $0xa0] sm:$0xff]
    %v208 = vld [vmem:[%s186 + $0xa8] sm:$0xff]
    %v209 = vld [vmem:[%s186 + $0xb0] sm:$0xff]
    %v210 = vld [vmem:[%s186 + $0xb8] sm:$0xff]
    %v211 = vld [vmem:[%s186 + $0xc0] sm:$0xff]
    %v212 = vld [vmem:[%s186 + $0xc8] sm:$0xff]
    %v213 = vld [vmem:[%s186 + $0xd0] sm:$0xff]
    %v214 = vld [vmem:[%s186 + $0xd8] sm:$0xff]
    %v215 = vld [vmem:[%s186 + $0xe0] sm:$0xff]
    %v216 = vld [vmem:[%s186 + $0xe8] sm:$0xff]
    %v217 = vld [vmem:[%s186 + $0xf0] sm:$0xff]
    %v218 = vld [vmem:[%s186 + $0xf8] sm:$0xff]
    %219 = vmatpush.msra.mxu0 %v202
    %220 = vmatpush.msra.mxu0 %v201
    %221 = vmatpush.msra.mxu0 %v200
    %222 = vmatpush.msra.mxu0 %v199
    %223 = vmatpush.msra.mxu0 %v198
    %224 = vmatpush.msra.mxu0 %v197
    %225 = vmatpush.msra.mxu0 %v196
    %226 = vmatpush.msra.mxu0 %v195
    %227 = vmatpush.msra.mxu0 %v194
    %228 = vmatpush.msra.mxu0 %v193
    %229 = vmatpush.msra.mxu0 %v192
    %230 = vmatpush.msra.mxu0 %v191
    %231 = vmatpush.msra.mxu0 %v190
    %232 = vmatpush.msra.mxu0 %v189
    %233 = vmatpush.msra.mxu0 %v188
    %234 = vmatpush.msra.mxu0 %v187
    %235 = vmatmul.f32.gmra.mxu0 %v179
    %v236 = vpop.f32.mrf.mxu0
    %v237 = vadd.f32 0.0, %v236
    %238 = vmatmul.f32.gmra.mxu0 %v181
    %v239 = vpop.f32.mrf.mxu0
    %v240 = vadd.f32 0.0, %v239
    %241 = vdwg.mxu0
    %242 = vmatpush.msra.mxu0 %v218
    %243 = vmatpush.msra.mxu0 %v217
    %244 = vmatpush.msra.mxu0 %v216
    %245 = vmatpush.msra.mxu0 %v215
    %246 = vmatpush.msra.mxu0 %v214
    %247 = vmatpush.msra.mxu0 %v213
    %248 = vmatpush.msra.mxu0 %v212
    %249 = vmatpush.msra.mxu0 %v211
    %250 = vmatpush.msra.mxu0 %v210
    %251 = vmatpush.msra.mxu0 %v209
    %252 = vmatpush.msra.mxu0 %v208
    %253 = vmatpush.msra.mxu0 %v207
    %254 = vmatpush.msra.mxu0 %v206
    %255 = vmatpush.msra.mxu0 %v205
    %256 = vmatpush.msra.mxu0 %v204
    %257 = vmatpush.msra.mxu0 %v203
    %258 = vmatmul.f32.gmra.mxu0 %v180
    %v259 = vpop.f32.mrf.mxu0
    %v260 = vadd.f32 %v237, %v259
    %261 = vmatmul.f32.gmra.mxu0 %v182
    %v262 = vpop.f32.mrf.mxu0
    %v263 = vadd.f32 %v240, %v262
    %264 = vdwg.mxu0
    %v265 = vadd.f32 %v183, %v260
    %v266 = vadd.f32 %v184, %v263
    %267 = vst [vmem:[#allocation2] sm:$0xff] %v265
    %268 = vst [vmem:[#allocation2 + $0x8] sm:$0xff] %v266
    // Predicated region
    $region42: #{tpu_custom_call.1} parent=1 // pred_check
      %p269 = pneg %p82
    $region43: #{tpu_custom_call.1} parent=1 // pred_check_branch
      %271 = sbr.rel (%p269) target = $region45
    $region44: #{tpu_custom_call.1} parent=1 // pred_region
      %v272 = vld [vmem:[#allocation2] sm:$0xff]
      %v273 = vld [vmem:[#allocation2 + $0x8] sm:$0xff]
      %v274 = vld [vmem:[%s4] sm:$0x1]
      %v276 = vperm.slane %v274, 0
      %v278 = vadd.f32 %v272, %v276
      %v279 = vadd.f32 %v273, %v276
      %280 = vst [vmem:[#allocation11] sm:$0xff] %v278
      %281 = vst [vmem:[#allocation11 + $0x8] sm:$0xff] %v279
    $region45: #{tpu_custom_call.1} parent=1 // pred_fallthru
      _
    // Predicated region
    $region46: #{tpu_custom_call.1} parent=1 // pred_check
      _
    $region47: #{tpu_custom_call.1} parent=1 // pred_check_branch
      %283 = sbr.rel (0) target = $region49
    $region48: #{tpu_custom_call.1} parent=1 // pred_region
      %285 = vsyncadd [#allocation5], 0
      %s286 = sshll.u32 [#allocation11], 4
      %s287 = int_to_ptr.vmem [resolvable:$true] %s286
      %s288 = sshll.u32 %s5, 4
      %s289 = int_to_ptr.hbm [resolvable:$true] %s288
      %294 = dma.vmem_to_hbm [thread:$0]  %s287, 256, %s289, [#allocation5], 128, 128, 8
    $region49: #{tpu_custom_call.1} parent=1 // pred_fallthru
      _
    // Predicated region
    $region50: #{tpu_custom_call.1} parent=1 // pred_check
      _
    $region51: #{tpu_custom_call.1} parent=1 // pred_check_branch
      %296 = sbr.rel (0) target = $region53
    $region52: #{tpu_custom_call.1} parent=1 // pred_region
      %298 = dma.done [#allocation5], 256
    $region53: #{tpu_custom_call.1} parent=1 // pred_fallthru
      _
    %299 = vsyncpa [#allocation4], 1
    %300 = vsyncpa [#allocation7], 1
    %301 = vsyncpa [#allocation10], 1
    %302 = vsyncpa [#allocation5], 1

</llo_original>
